<compile_context>
chip_gen: v5e
topology: v5e:2x2
jax: 0.10.0
libtpu: 0.0.40
codegen_flags: <defaults>
</compile_context>

<pallas_src>
import jax
import jax.numpy as jnp
from jax.experimental import pallas as pl
from jax.experimental.pallas import tpu as pltpu


def _adjacent_abs_diff_sum(s, axis):
    """sum over valid (non-wrap) pairs of |s[..., j, ...] - s[..., j+1, ...]|."""
    axis = axis % s.ndim
    n = s.shape[axis]
    if n <= 1:
        return jnp.float32(0.0)
    is_lane_axis = axis == s.ndim - 1
    req = 128 if is_lane_axis else 8       # per-axis alignment check
    if n % req == 0:
        # Roll-and-mask on full aligned vregs (XLU rotate is free here): a
        # shift of n-1 (== -1 mod n) brings element j+1 to position j; the
        # wrap column/row is zeroed with an iota mask.
        nxt = pltpu.roll(s, shift=n - 1, axis=axis)
        idx = jax.lax.broadcasted_iota(jnp.int32, s.shape, axis)
        d = jnp.where(idx < n - 1, s - nxt, 0.0)
    else:
        # Small / unaligned axis: plain slices.
        a = jax.lax.slice_in_dim(s, 0, n - 1, axis=axis)
        b = jax.lax.slice_in_dim(s, 1, n, axis=axis)
        d = a - b
    return jnp.sum(jnp.abs(d))


def _tv_partial_kernel(x_ref, out_ref, prev_row_ref):
    # x_ref:        (TB, C, TH, W) input block.
    # out_ref:      (1, 8, 128) f32 per-batch-block partials, resident across
    #               the H grid axis (sublane 0 = sum|d_h|, sublane 1 = sum|d_v|).
    # prev_row_ref: (TB, 1, W) f32 carried channel-summed boundary row.
    hi = pl.program_id(1)
    _, C, TH, _ = x_ref.shape

    # Fused f32 cast + channel reduction: never materialize an f32 copy of the
    # whole block; accumulate channel slices into one (TB, TH, W) f32 value.
    s = x_ref[:, 0, :, :].astype(jnp.float32)
    for c in range(1, C):
        s = s + x_ref[:, c, :, :].astype(jnp.float32)

    @pl.when(hi == 0)
    def _():
        out_ref[...] = jnp.zeros_like(out_ref)
        # Seed the carried boundary row so the cross-tile diff is 0 at hi==0.
        prev_row_ref[...] = s[:, 0:1, :]

    h_sum = _adjacent_abs_diff_sum(s, axis=2)      # horizontal (lane axis)
    v_sum = _adjacent_abs_diff_sum(s, axis=1)      # vertical, within this tile
    # Cross-H-tile vertical pair: previous tile's last row vs this tile's row 0.
    v_sum = v_sum + jnp.sum(jnp.abs(prev_row_ref[...] - s[:, 0:1, :]))
    # Carry this tile's last row for the next H step.
    prev_row_ref[...] = s[:, TH - 1:TH, :]

    # NOTE: each step collapses to one f32 scalar per direction; if tighter
    # numerics are ever needed, keep per-lane partials in the (1,8,128) block
    # and finish the reduction wrapper-side.
    sub = jax.lax.broadcasted_iota(jnp.int32, out_ref.shape, 1)
    out_ref[...] = out_ref[...] + jnp.where(
        sub == 0, h_sum, jnp.where(sub == 1, v_sum, 0.0))


def _choose_tile_h(H, per_row_bytes, target_bytes):
    """Largest H tile (full H, or a multiple-of-8 divisor of H) under budget."""
    if H * per_row_bytes <= target_bytes:
        return H
    cands = [th for th in range(8, H, 8) if H % th == 0]
    fitting = [th for th in cands if th * per_row_bytes <= target_bytes]
    if fitting:
        return max(fitting)
    return min(cands) if cands else H


def _choose_batch_block(N, per_img_block_bytes, target_bytes):
    """Largest divisor of N under budget, keeping grid_n >= 2 when N >= 2
    (so v7x's two TensorCores both get work on the 'parallel' axis)."""
    min_grid = 2 if N >= 2 else 1
    best = 1
    for bb in range(1, N + 1):
        if N % bb == 0 and N // bb >= min_grid and bb * per_img_block_bytes <= target_bytes:
            best = bb
    return best


def total_variation_loss(img, *, batch_block=None, tile_h=None,
                         block_target_bytes=2 << 20):
    """img: (N, C, H, W). Returns scalar f32 loss (matches the PyTorch module)."""
    N, C, H, W = img.shape
    itemsize = jnp.dtype(img.dtype).itemsize

    per_row_bytes = C * W * itemsize
    if tile_h is None:
        tile_h = _choose_tile_h(H, per_row_bytes, block_target_bytes)
    if H % tile_h != 0:
        raise ValueError("tile_h must divide H")
    if tile_h != H and tile_h % 8 != 0:
        raise ValueError("tile_h must be H or a multiple of 8")

    per_img_block_bytes = C * tile_h * W * itemsize
    if batch_block is None:
        batch_block = _choose_batch_block(N, per_img_block_bytes, block_target_bytes)
    if N % batch_block != 0:
        raise ValueError("batch_block must divide N")

    grid_n = N // batch_block
    grid_h = H // tile_h

    # Explicit VMEM budget: double-buffered input block + f32 channel-sum
    # working set + headroom; clamped to 64 MiB (v7x physical per-TC VMEM).
    in_block_bytes = batch_block * per_img_block_bytes
    s_bytes = batch_block * tile_h * max(W, 128) * 4
    vmem_limit_bytes = int(min(64 * 1024 * 1024,
                               max(16 * 1024 * 1024,
                                   2 * in_block_bytes + 4 * s_bytes + (4 << 20))))

    partial = pl.pallas_call(
        _tv_partial_kernel,
        out_shape=jax.ShapeDtypeStruct((grid_n, 8, 128), jnp.float32),
        grid_spec=pltpu.PrefetchScalarGridSpec(
            num_scalar_prefetch=0,
            grid=(grid_n, grid_h),
            in_specs=[
                pl.BlockSpec((batch_block, C, tile_h, W),
                             lambda b, h: (b, 0, h, 0)),
            ],
            out_specs=pl.BlockSpec((1, 8, 128), lambda b, h: (b, 0, 0)),
            scratch_shapes=[pltpu.VMEM((batch_block, 1, W), jnp.float32)],
        ),
        compiler_params=pltpu.CompilerParams(
            dimension_semantics=("parallel", "arbitrary"),
            vmem_limit_bytes=vmem_limit_bytes,
        ),
    )(img)

    # Tiny final reduction + normalization in plain JAX.  The kernel summed
    # channel *sums*, so fold 1/C into torch.mean's denominators.
    h_total = jnp.sum(partial[:, 0, 0])
    v_total = jnp.sum(partial[:, 1, 0])
    mean_h = h_total / jnp.float32(N * C * H * (W - 1))
    mean_v = v_total / jnp.float32(N * C * (H - 1) * W)
    return mean_h + mean_v


def total_variation_loss_ref(img):
    """Pure-JAX reference matching the PyTorch module exactly."""
    m = jnp.mean(img, axis=1, keepdims=True).astype(jnp.float32)   # (N,1,H,W)
    d_h = m[:, :, :, :-1] - m[:, :, :, 1:]
    d_v = m[:, :, :-1, :] - m[:, :, 1:, :]
    return jnp.mean(jnp.abs(d_h)) + jnp.mean(jnp.abs(d_v))


if __name__ == "__main__":
    key = jax.random.PRNGKey(0)
    k1, k2 = jax.random.split(key)

    # Small shape consistent with the module: (N, C, H, W) = (2, 4, 16, 16).
    x = jax.random.normal(k1, (2, 4, 16, 16), dtype=jnp.float32)
    ref = total_variation_loss_ref(x)

    # Auto block selection (one image per step -> grid_n = 2, parallel axis).
    loss = jax.block_until_ready(total_variation_loss(x))
    assert jnp.allclose(loss, ref, atol=1e-5, rtol=1e-5), (loss, ref)

    # Explicit multi-image block (amortizes per-step overhead).
    loss_b = jax.block_until_ready(total_variation_loss(x, batch_block=2))
    assert jnp.allclose(loss_b, ref, atol=1e-5, rtol=1e-5), (loss_b, ref)

    # Larger plane exercising the aligned lane-roll path (W % 128 == 0) and the
    # H-tiling boundary-row carry (tile_h=8 -> 4 H steps per image).
    x2 = jax.random.normal(k2, (2, 3, 32, 256), dtype=jnp.float32)
    ref2 = total_variation_loss_ref(x2)
    loss2 = jax.block_until_ready(total_variation_loss(x2, tile_h=8))
    assert jnp.allclose(loss2, ref2, atol=2e-4, rtol=2e-4), (loss2, ref2)

    print("KERNEL_OK")
</pallas_src>

<mosaic_0001>
module attributes {stable_mosaic.version = 11 : i64} {
  func.func @_tv_partial_kernel(%arg0: i32, %arg1: i32, %arg2: memref<1x4x16x16xf32, #tpu.memory_space<vmem>>, %arg3: memref<1x8x128xf32, #tpu.memory_space<vmem>>, %arg4: memref<1x1x16xf32, #tpu.memory_space<vmem>>) attributes {dimension_semantics = [#tpu.dimension_semantics<parallel>, #tpu.dimension_semantics<arbitrary>], iteration_bounds = array<i64: 2, 1>, scalar_prefetch = 0 : i64, scratch_operands = 1 : i64, tpu.core_type = #tpu.core_type<tc>, window_params = [{transform_indices = @transform_0, window_bounds = array<i64: 1, 4, 16, 16>}, {transform_indices = @transform_1, window_bounds = array<i64: 1, 8, 128>}]} {
    %c0 = arith.constant 0 : index
    %c0_0 = arith.constant 0 : index
    %c0_1 = arith.constant 0 : index
    %c0_2 = arith.constant 0 : index
    %0 = vector.load %arg2[%c0, %c0_0, %c0_1, %c0_2] : memref<1x4x16x16xf32, #tpu.memory_space<vmem>>, vector<1x1x16x16xf32>
    %1 = vector.shape_cast %0 : vector<1x1x16x16xf32> to vector<1x16x16xf32>
    %c0_3 = arith.constant 0 : index
    %c1 = arith.constant 1 : index
    %c0_4 = arith.constant 0 : index
    %c0_5 = arith.constant 0 : index
    %2 = vector.load %arg2[%c0_3, %c1, %c0_4, %c0_5] : memref<1x4x16x16xf32, #tpu.memory_space<vmem>>, vector<1x1x16x16xf32>
    %3 = vector.shape_cast %2 : vector<1x1x16x16xf32> to vector<1x16x16xf32>
    %4 = arith.addf %1, %3 : vector<1x16x16xf32>
    %c0_6 = arith.constant 0 : index
    %c2 = arith.constant 2 : index
    %c0_7 = arith.constant 0 : index
    %c0_8 = arith.constant 0 : index
    %5 = vector.load %arg2[%c0_6, %c2, %c0_7, %c0_8] : memref<1x4x16x16xf32, #tpu.memory_space<vmem>>, vector<1x1x16x16xf32>
    %6 = vector.shape_cast %5 : vector<1x1x16x16xf32> to vector<1x16x16xf32>
    %7 = arith.addf %4, %6 : vector<1x16x16xf32>
    %c0_9 = arith.constant 0 : index
    %c3 = arith.constant 3 : index
    %c0_10 = arith.constant 0 : index
    %c0_11 = arith.constant 0 : index
    %8 = vector.load %arg2[%c0_9, %c3, %c0_10, %c0_11] : memref<1x4x16x16xf32, #tpu.memory_space<vmem>>, vector<1x1x16x16xf32>
    %9 = vector.shape_cast %8 : vector<1x1x16x16xf32> to vector<1x16x16xf32>
    %10 = arith.addf %7, %9 : vector<1x16x16xf32>
    %c0_i32 = arith.constant 0 : i32
    %11 = arith.cmpi eq, %arg1, %c0_i32 : i32
    %12 = arith.extui %11 : i1 to i32
    %c0_i32_12 = arith.constant 0 : i32
    %13 = arith.cmpi ne, %12, %c0_i32_12 : i32
    scf.if %13 {
      %cst_31 = arith.constant 0.000000e+00 : f32
      %58 = vector.broadcast %cst_31 : f32 to vector<1x8x128xf32>
      %c0_32 = arith.constant 0 : index
      %c0_33 = arith.constant 0 : index
      %c0_34 = arith.constant 0 : index
      %59 = vector.load %arg3[%c0_32, %c0_33, %c0_34] : memref<1x8x128xf32, #tpu.memory_space<vmem>>, vector<1x8x128xf32>
      tpu.vector_store %arg3[%c0_32, %c0_33, %c0_34], %58 {strides = array<i32>} : memref<1x8x128xf32, #tpu.memory_space<vmem>>, vector<1x8x128xf32>,
      %60 = vector.extract_strided_slice %10 {offsets = [0, 0, 0], sizes = [1, 1, 16], strides = [1, 1, 1]} : vector<1x16x16xf32> to vector<1x1x16xf32>
      %c0_35 = arith.constant 0 : index
      %c0_36 = arith.constant 0 : index
      %c0_37 = arith.constant 0 : index
      %61 = vector.load %arg4[%c0_35, %c0_36, %c0_37] : memref<1x1x16xf32, #tpu.memory_space<vmem>>, vector<1x1x16xf32>
      tpu.vector_store %arg4[%c0_35, %c0_36, %c0_37], %60 {strides = array<i32>} : memref<1x1x16xf32, #tpu.memory_space<vmem>>, vector<1x1x16xf32>,
    } else {
    }
    %14 = vector.extract_strided_slice %10 {offsets = [0, 0, 0], sizes = [1, 16, 15], strides = [1, 1, 1]} : vector<1x16x16xf32> to vector<1x16x15xf32>
    %15 = vector.extract_strided_slice %10 {offsets = [0, 0, 1], sizes = [1, 16, 15], strides = [1, 1, 1]} : vector<1x16x16xf32> to vector<1x16x15xf32>
    %16 = arith.subf %14, %15 : vector<1x16x15xf32>
    %17 = math.absf %16 : vector<1x16x15xf32>
    %18 = vector.shape_cast %17 : vector<1x16x15xf32> to vector<1x1x16x15xf32>
    %cst = arith.constant dense<0.000000e+00> : vector<1xf32>
    %19 = vector.multi_reduction <add>, %18, %cst [1, 2, 3] : vector<1x1x16x15xf32> to vector<1xf32>
    %20 = vector.shape_cast %19 : vector<1xf32> to vector<1x1x1x1xf32>
    %21 = vector.extract %20[0, 0, 0, 0] : f32 from vector<1x1x1x1xf32>
    %c15_i32 = arith.constant 15 : i32
    %22 = tpu.dynamic_rotate %10 by %c15_i32 dim 1 : vector<1x16x16xf32>, i32 -> vector<1x16x16xf32>
    %23 = tpu.iota {dimensions = array<i32: 1>} : vector<1x16x16xi32>
    %c15_i32_13 = arith.constant 15 : i32
    %24 = vector.broadcast %c15_i32_13 : i32 to vector<1x16x16xi32>
    %25 = arith.cmpi slt, %23, %24 : vector<1x16x16xi32>
    %26 = arith.subf %10, %22 : vector<1x16x16xf32>
    %cst_14 = arith.constant 0.000000e+00 : f32
    %27 = vector.broadcast %cst_14 : f32 to vector<1x16x16xf32>
    %28 = arith.select %25, %26, %27 : vector<1x16x16xi1>, vector<1x16x16xf32>
    %29 = math.absf %28 : vector<1x16x16xf32>
    %30 = vector.shape_cast %29 : vector<1x16x16xf32> to vector<1x1x16x16xf32>
    %cst_15 = arith.constant dense<0.000000e+00> : vector<1xf32>
    %31 = vector.multi_reduction <add>, %30, %cst_15 [1, 2, 3] : vector<1x1x16x16xf32> to vector<1xf32>
    %32 = vector.shape_cast %31 : vector<1xf32> to vector<1x1x1x1xf32>
    %33 = vector.extract %32[0, 0, 0, 0] : f32 from vector<1x1x1x1xf32>
    %c0_16 = arith.constant 0 : index
    %c0_17 = arith.constant 0 : index
    %c0_18 = arith.constant 0 : index
    %34 = vector.load %arg4[%c0_16, %c0_17, %c0_18] : memref<1x1x16xf32, #tpu.memory_space<vmem>>, vector<1x1x16xf32>
    %35 = vector.extract_strided_slice %10 {offsets = [0, 0, 0], sizes = [1, 1, 16], strides = [1, 1, 1]} : vector<1x16x16xf32> to vector<1x1x16xf32>
    %36 = arith.subf %34, %35 : vector<1x1x16xf32>
    %37 = math.absf %36 : vector<1x1x16xf32>
    %38 = vector.shape_cast %37 : vector<1x1x16xf32> to vector<1x1x1x16xf32>
    %cst_19 = arith.constant dense<0.000000e+00> : vector<1xf32>
    %39 = vector.multi_reduction <add>, %38, %cst_19 [1, 2, 3] : vector<1x1x1x16xf32> to vector<1xf32>
    %40 = vector.shape_cast %39 : vector<1xf32> to vector<1x1x1x1xf32>
    %41 = vector.extract %40[0, 0, 0, 0] : f32 from vector<1x1x1x1xf32>
    %42 = arith.addf %33, %41 : f32
    %43 = vector.extract_strided_slice %10 {offsets = [0, 15, 0], sizes = [1, 1, 16], strides = [1, 1, 1]} : vector<1x16x16xf32> to vector<1x1x16xf32>
    %c0_20 = arith.constant 0 : index
    %c0_21 = arith.constant 0 : index
    %c0_22 = arith.constant 0 : index
    %44 = vector.load %arg4[%c0_20, %c0_21, %c0_22] : memref<1x1x16xf32, #tpu.memory_space<vmem>>, vector<1x1x16xf32>
    tpu.vector_store %arg4[%c0_20, %c0_21, %c0_22], %43 {strides = array<i32>} : memref<1x1x16xf32, #tpu.memory_space<vmem>>, vector<1x1x16xf32>,
    %45 = tpu.iota {dimensions = array<i32: 1>} : vector<1x8x128xi32>
    %c0_23 = arith.constant 0 : index
    %c0_24 = arith.constant 0 : index
    %c0_25 = arith.constant 0 : index
    %46 = vector.load %arg3[%c0_23, %c0_24, %c0_25] : memref<1x8x128xf32, #tpu.memory_space<vmem>>, vector<1x8x128xf32>
    %c0_i32_26 = arith.constant 0 : i32
    %47 = vector.broadcast %c0_i32_26 : i32 to vector<1x8x128xi32>
    %48 = arith.cmpi eq, %45, %47 : vector<1x8x128xi32>
    %c1_i32 = arith.constant 1 : i32
    %49 = vector.broadcast %c1_i32 : i32 to vector<1x8x128xi32>
    %50 = arith.cmpi eq, %45, %49 : vector<1x8x128xi32>
    %cst_27 = arith.constant 0.000000e+00 : f32
    %51 = vector.broadcast %42 : f32 to vector<1x8x128xf32>
    %52 = vector.broadcast %cst_27 : f32 to vector<1x8x128xf32>
    %53 = arith.select %50, %51, %52 : vector<1x8x128xi1>, vector<1x8x128xf32>
    %54 = vector.broadcast %21 : f32 to vector<1x8x128xf32>
    %55 = arith.select %48, %54, %53 : vector<1x8x128xi1>, vector<1x8x128xf32>
    %56 = arith.addf %46, %55 : vector<1x8x128xf32>
    %c0_28 = arith.constant 0 : index
    %c0_29 = arith.constant 0 : index
    %c0_30 = arith.constant 0 : index
    %57 = vector.load %arg3[%c0_28, %c0_29, %c0_30] : memref<1x8x128xf32, #tpu.memory_space<vmem>>, vector<1x8x128xf32>
    tpu.vector_store %arg3[%c0_28, %c0_29, %c0_30], %56 {strides = array<i32>} : memref<1x8x128xf32, #tpu.memory_space<vmem>>, vector<1x8x128xf32>,
    return
  }
  func.func @transform_0(%arg0: i32, %arg1: i32) -> (i32, i32, i32, i32) {
    %c0_i32 = arith.constant 0 : i32
    %c0_i32_0 = arith.constant 0 : i32
    %c0_i32_1 = arith.constant 0 : i32
    return %arg0, %c0_i32, %arg1, %c0_i32_0 : i32, i32, i32, i32
  }
  func.func @transform_1(%arg0: i32, %arg1: i32) -> (i32, i32, i32) {
    %c0_i32 = arith.constant 0 : i32
    %c0_i32_0 = arith.constant 0 : i32
    %c0_i32_1 = arith.constant 0 : i32
    return %arg0, %c0_i32, %c0_i32_0 : i32, i32, i32
  }
}

</mosaic_0001>

<llo_original>
// kernel: tpu_custom_call.1
$region0: #{tpu_custom_call.1}
  #allocation0 [shape = 'u32[]', space=smem, size = 0x4, offset = 0x4, fixed_abs, tag = 'smem constant byte address 0x4 - core index']
  #allocation1 [shape = 'u32[72,128]{1,0:T(1,128)}', space=vmem, size = 0x9000, scoped, tag = 'internal scratch']
  #allocation2 [shape = 'f32[1,1,16]{2,1,0:T(1,128)}', space=vmem, size = 0x200, scoped, tag = 'scratch operand']
  %s0 = inlined_call_operand.hbm [shape: f32[2,4,16,16], index: 0, kind: input, shape index: {}]
  %s1 = inlined_call_operand.hbm [shape: f32[2,8,128], index: 1, kind: output, shape index: {}]
  %s2 = sld [smem:[#allocation0]]
  $region45: #{tpu_custom_call.1} parent=0
    _
  %s4 = ssub.s32 1, %s2
  %s5 = scalar_select 0, %s4, %s2
  $region1: #{tpu_custom_call.1} parent=0
    #allocation3 [shape = 'u8[65536]{0}', space=vmem, size = 0x10000, scoped, tag = 'input window, operand 0']
    #allocation4 [shape = 's32[2]{0}', space=sflag, size = 0x8, scoped, tag = 'scoped memory for tpu_custom_call.1']
    #allocation5 [shape = 's32[2]{0}', space=sflag, size = 0x8, scoped, tag = 'scoped memory for tpu_custom_call.1']
    #allocation6 [shape = 'u8[8192]{0}', space=vmem, size = 0x2000, scoped, tag = 'output window, operand 0']
    %6 = vsyncpa [#allocation4], 0
    %s7 = scalar_lea.sflag [#allocation4], 1
    %8 = vsyncpa %s7, 0
    %9 = vsyncpa [#allocation5], 0
    %s10 = scalar_lea.sflag [#allocation5], 1
    %11 = vsyncpa %s10, 0
    loop: start=0, step=1, limit=4
    $region2: #{tpu_custom_call.1} parent=1 // loop_pre_header
      _
    $region3: #{tpu_custom_call.1} parent=1 // loop_header
      %s13 = sphi 0, %s17
      %p14 = scmp.ge.s32.totalorder %s13, 4
      %s20 = sphi 0, %s32
      %s21 = sphi 0, %s28
      %s22 = sphi 0, %s20
      %s23 = sphi 0, %s21
      %s24 = sphi 0, %s22
      %s25 = sphi 0, %s23
      %s37 = sphi 0, %s39
      %s40 = sphi 0, %s37
      %s41 = sphi 0, %s40
      %s57 = sphi 0, %s41
      %s63 = sphi 0, %s65
      %s66 = sphi 0, %s63
      %s67 = sphi 0, %s66
      %s83 = sphi 0, %s67
    $region4: #{tpu_custom_call.1} parent=1 // loop_header_branch
      %16 = sbr.rel (%p14) target = $region8
    $region5: #{tpu_custom_call.1} parent=1 // loop_body
      %s18 = ssub.s32 %s13, 1
      %s19 = ssub.s32 %s13, 2
      %s26 = sadd.s32 1, %s21
      %p27 = scmp.ge.s32.totalorder %s26, 1
      %s28 = scalar_select %p27, 0, %s26
      %s29 = sadd.s32 1, %s20
      %s30 = scalar_select %p27, %s29, %s20
      %p31 = scmp.ge.s32.totalorder %s30, 2
      %s32 = scalar_select %p31, 0, %s30
      %s33 = ssub.s32 %s20, %s32
      %s34 = ssub.s32 %s21, %s28
      %s35 = sor.u32 %s33, %s34
      %p36 = scmp.eq.s32.totalorder %s35, 0
      %s38 = sadd.s32 %s37, 1
      %s39 = scalar_select %p36, %s37, %s38
      %p42 = pneg %p36
      %p43 = scmp.eq.s32.totalorder %s13, 1
      %p44 = por %p42, %p43
      %p45 = scmp.ne.s32.totalorder %s37, %s40
      %p46 = scmp.eq.s32.totalorder %s13, 0
      %p47 = por %p45, %p46
      %p48 = scmp.ne.s32.totalorder %s37, %s40
      %p49 = scmp.eq.s32.totalorder %s18, 1
      %p50 = por %p48, %p49
      %p51 = scmp.ne.s32.totalorder %s40, %s41
      %p52 = scmp.eq.s32.totalorder %s18, 0
      %p53 = por %p51, %p52
      %p54 = scmp.ne.s32.totalorder %s40, %s41
      %p55 = scmp.eq.s32.totalorder %s19, 1
      %p56 = por %p54, %p55
      %p58 = scmp.ne.s32.totalorder %s41, %s57
      %p59 = scmp.eq.s32.totalorder %s19, 0
      %p60 = por %p58, %p59
      %s61 = ssub.s32 %s20, %s32
      %p62 = scmp.eq.s32.totalorder %s61, 0
      %s64 = sadd.s32 %s63, 1
      %s65 = scalar_select %p62, %s63, %s64
      %p68 = pneg %p62
      %p69 = scmp.eq.s32.totalorder %s13, 1
      %p70 = por %p68, %p69
      %p71 = scmp.ne.s32.totalorder %s63, %s66
      %p72 = scmp.eq.s32.totalorder %s13, 0
      %p73 = por %p71, %p72
      %p74 = scmp.ne.s32.totalorder %s63, %s66
      %p75 = scmp.eq.s32.totalorder %s18, 1
      %p76 = por %p74, %p75
      %p77 = scmp.ne.s32.totalorder %s66, %s67
      %p78 = scmp.eq.s32.totalorder %s18, 0
      %p79 = por %p77, %p78
      %p80 = scmp.ne.s32.totalorder %s66, %s67
      %p81 = scmp.eq.s32.totalorder %s19, 1
      %p82 = por %p80, %p81
      %p84 = scmp.ne.s32.totalorder %s67, %s83
      %p85 = scmp.eq.s32.totalorder %s19, 0
      %p86 = por %p84, %p85
      %p87 = scmp.le.s32.totalorder 1, %s13
      %p88 = scmp.lt.s32.totalorder %s13, 3
      %p89 = pnand %p87, %p88
      %p90 = pneg %p89
      // Predicated region
      $region9: #{tpu_custom_call.1} parent=5 // pred_check
        _
      $region10: #{tpu_custom_call.1} parent=5 // pred_check_branch
        %92 = sbr.rel (%p89) target = $region12
      $region11: #{tpu_custom_call.1} parent=5 // pred_region
        %s93 = ssub.s32 %s13, 1
      $region12: #{tpu_custom_call.1} parent=5 // pred_fallthru
        _
      %p94 = scmp.lt.s32.totalorder %s13, 2
      // Predicated region
      $region13: #{tpu_custom_call.1} parent=5 // pred_check
        %p95 = pneg %p94
      $region14: #{tpu_custom_call.1} parent=5 // pred_check_branch
        %97 = sbr.rel (%p95) target = $region16
      $region15: #{tpu_custom_call.1} parent=5 // pred_region
        // Predicated region
        $region17: #{tpu_custom_call.1} parent=15 // pred_check
          %p98 = pneg %p47
        $region18: #{tpu_custom_call.1} parent=15 // pred_check_branch
          %100 = sbr.rel (%p98) target = $region20
        $region19: #{tpu_custom_call.1} parent=15 // pred_region
          %s101 = sand.u32 %s37, 1
          %s102 = scalar_lea.sflag [#allocation4], %s101
          %s103 = sand.u32 %s37, 1
          %s104 = smul.addr %s103, 64
          %s105 = scalar_lea.vmem [#allocation3], %s104
          %s106 = smul.u32 2, %s21
          %108 = vsyncadd %s102, 0
          %s109 = smul.addr %s20, 8
          %s110 = sadd.s32 %s106, %s109
          %s111 = smul.addr %s110, 8
          %s112 = scalar_lea.hbm %s0, %s111
          %s113 = sshll.u32 %s112, 4
          %s114 = int_to_ptr.hbm [resolvable:$true] %s113
          %s115 = sshll.u32 %s105, 4
          %s116 = int_to_ptr.vmem [resolvable:$true] %s115
          %121 = dma.hbm_to_vmem [thread:$0]  %s114, 1024, %s116, %s102, 128, 128, 8
        $region20: #{tpu_custom_call.1} parent=15 // pred_fallthru
          _
      $region16: #{tpu_custom_call.1} parent=5 // pred_fallthru
        _
      %p122 = scmp.le.s32.totalorder 1, %s13
      %p123 = scmp.lt.s32.totalorder %s13, 3
      %p124 = pnand %p122, %p123
      %p125 = pneg %p124
      // Predicated region
      $region21: #{tpu_custom_call.1} parent=5 // pred_check
        _
      $region22: #{tpu_custom_call.1} parent=5 // pred_check_branch
        %127 = sbr.rel (%p124) target = $region24
      $region23: #{tpu_custom_call.1} parent=5 // pred_region
        %s128 = ssub.s32 %s13, 1
        %s129 = sand.u32 %s40, 1
        %s130 = scalar_lea.sflag [#allocation4], %s129
        %s131 = sand.u32 %s40, 1
        %s132 = smul.addr %s131, 64
        %s133 = scalar_lea.vmem [#allocation3], %s132
        // Predicated region
        $region25: #{tpu_custom_call.1} parent=23 // pred_check
          %p134 = pneg %p53
        $region26: #{tpu_custom_call.1} parent=23 // pred_check_branch
          %136 = sbr.rel (%p134) target = $region28
        $region27: #{tpu_custom_call.1} parent=23 // pred_region
          %138 = dma.done %s130, 1024
        $region28: #{tpu_custom_call.1} parent=23 // pred_fallthru
          _
        %s139 = sand.u32 %s40, 1
        %s140 = scalar_lea.sflag [#allocation4], %s139
        %s141 = sand.u32 %s40, 1
        %s142 = smul.addr %s141, 64
        %s143 = scalar_lea.vmem [#allocation3], %s142
        %p144 = pneg %p53
        %p145 = pneg %p50
        %p146 = pneg %p79
        %p147 = pneg %p76
        %s148 = sand.u32 %s66, 1
        %s149 = scalar_lea.sflag [#allocation5], %s148
        %s150 = sand.u32 %s66, 1
        %s151 = smul.addr %s150, 8
        %s152 = scalar_lea.vmem [#allocation6], %s151
        %s153 = smul.u32 2, %s23
        %v154 = vld [vmem:[%s133] sm:$0xff]
        %v155 = vld [vmem:[%s133 + $0x8] sm:$0xff]
        %s156 = scalar_lea.vmem %s133, 16 [#allocation3]
        %v157 = vld [vmem:[%s156] sm:$0xff]
        %v158 = vld [vmem:[%s156 + $0x8] sm:$0xff]
        %v159 = vadd.f32 %v154, %v157
        %v160 = vadd.f32 %v155, %v158
        %s161 = scalar_lea.vmem %s133, 32 [#allocation3]
        %v162 = vld [vmem:[%s161] sm:$0xff]
        %v163 = vld [vmem:[%s161 + $0x8] sm:$0xff]
        %v164 = vadd.f32 %v159, %v162
        %v165 = vadd.f32 %v160, %v163
        %s166 = scalar_lea.vmem %s133, 48 [#allocation3]
        %v167 = vld [vmem:[%s166] sm:$0xff]
        %v168 = vld [vmem:[%s166 + $0x8] sm:$0xff]
        %v169 = vadd.f32 %v164, %v167
        %v170 = vadd.f32 %v165, %v168
        %p171 = scmp.eq.s32.totalorder %s23, 0
        // Predicated region
        $region29: #{tpu_custom_call.1} parent=23 // pred_check
          %p172 = pneg %p171
        $region30: #{tpu_custom_call.1} parent=23 // pred_check_branch
          %174 = sbr.rel (%p172) target = $region32
        $region31: #{tpu_custom_call.1} parent=23 // pred_region
          %175 = vst [vmem:[%s152] sm:$0xff] 0.0
          %vm176 = vcmask 122880
          %177 = vst.msk [vmem:[#allocation2] sm:$0x1] %vm176, %v169
        $region32: #{tpu_custom_call.1} parent=23 // pred_fallthru
          _
        %180 = vrot.lane.b32.xlu0 %v169, 127
        %v181 = vpop.permute.xlu0 %180
        %182 = vrot.lane.b32.xlu0 %v170, 127
        %v183 = vpop.permute.xlu0 %182
        %v186 = vsub.f32 %v169, %v181
        %v187 = vsub.f32 %v170, %v183
        %v188 = vand.u32 2147483647, %v186
        %v189 = vand.u32 2147483647, %v187
        %vm190 = vcmask 121856
        %v191 = vsel %vm190, %v188, 0.0
        %v192 = vsel %vm190, %v189, 0.0
        %v193 = vadd.f32 %v191, %v192
        %194 = vadd.xlane.f32.xlu0 %v193
        %v195 = vpop.xlane.xlu0 %194
        %v196 = vrot.slane %v195, 4
        %v197 = vadd.f32 %v195, %v196
        %v198 = vrot.slane %v197, 2
        %v199 = vadd.f32 %v197, %v198
        %v200 = vrot.slane %v199, 1
        %v201 = vadd.f32 %v199, %v200
        %s202 = vtos %v201
        %v203 = vrot.slane %v169, 1
        %v204 = vrot.slane %v170, 1
        %v205 = vlaneseq
        %v206 = vshrl.u32 %v205, 7
        %vm207 = vcmp.lt.s32.totalorder %v206, 7
        %v208 = vsel %vm207, %v203, %v204
        %v209 = vsel %vm207, %v204, %v203
        %v210 = vadd.s32 %v206, 8
        %vm211 = vcmp.lt.s32.totalorder %v206, 15
        %vm212 = vcmp.lt.s32.totalorder %v210, 15
        %v213 = vsub.f32 %v169, %v208
        %v214 = vsub.f32 %v170, %v209
        %v215 = vsel %vm211, %v213, 0.0
        %v216 = vsel %vm212, %v214, 0.0
        %v217 = vand.u32 2147483647, %v215
        %v218 = vand.u32 2147483647, %v216
        %vm219 = vcmask 130048
        %v220 = vsel %vm219, %v217, 0.0
        %v221 = vsel %vm219, %v218, 0.0
        %v222 = vadd.f32 %v220, %v221
        %223 = vadd.xlane.f32.xlu0 %v222
        %v224 = vpop.xlane.xlu0 %223
        %v225 = vrot.slane %v224, 4
        %v226 = vadd.f32 %v224, %v225
        %v227 = vrot.slane %v226, 2
        %v228 = vadd.f32 %v226, %v227
        %v229 = vrot.slane %v228, 1
        %v230 = vadd.f32 %v228, %v229
        %s231 = vtos %v230
        %v232 = vld [vmem:[#allocation2] sm:$0x1]
        %v233 = vsub.f32 %v232, %v169
        %v234 = vand.u32 2147483647, %v233
        %vm235 = vcmask 122880
        %v236 = vsel %vm235, %v234, 0.0
        %237 = vadd.xlane.f32.xlu0 %v236
        %v238 = vpop.xlane.xlu0 %237
        %v239 = vrot.slane %v238, 4
        %v240 = vadd.f32 %v238, %v239
        %v241 = vrot.slane %v240, 2
        %v242 = vadd.f32 %v240, %v241
        %v243 = vrot.slane %v242, 1
        %v244 = vadd.f32 %v242, %v243
        %s245 = vtos %v244
        %s246 = sadd.f32 %s231, %s245
        %vm247 = vcmask 130055
        %248 = vst.msk [vmem:[#allocation2 - $0x7] sm:$0x80] %vm247, %v170
        %v249 = vld [vmem:[%s152] sm:$0xff]
        %vm250 = vcmp.eq.s32.totalorder %v206, 0
        %vm251 = vcmp.eq.s32.totalorder %v206, 1
        %v252 = vstv %s246
        %v253 = vsel %vm251, %v252, 0.0
        %v254 = vstv %s202
        %v255 = vsel %vm250, %v254, %v253
        %v256 = vadd.f32 %v249, %v255
        %257 = vst [vmem:[%s152] sm:$0xff] %v256
        %s258 = sand.u32 %s66, 1
        %s259 = scalar_lea.sflag [#allocation5], %s258
        %s260 = sand.u32 %s66, 1
        %s261 = smul.addr %s260, 8
        %s262 = scalar_lea.vmem [#allocation6], %s261
        // Predicated region
        $region33: #{tpu_custom_call.1} parent=23 // pred_check
          %p263 = pneg %p76
        $region34: #{tpu_custom_call.1} parent=23 // pred_check_branch
          %265 = sbr.rel (%p263) target = $region36
        $region35: #{tpu_custom_call.1} parent=23 // pred_region
          %267 = vsyncadd %s259, 0
          %s268 = smul.addr %s22, 8
          %s269 = scalar_lea.hbm %s1, %s268
          %s271 = sshll.u32 %s262, 4
          %s272 = int_to_ptr.vmem [resolvable:$true] %s271
          %s273 = sshll.u32 %s269, 4
          %s274 = int_to_ptr.hbm [resolvable:$true] %s273
          %276 = dma.vmem_to_hbm [thread:$0]  %s272, 128, %s274, %s259
        $region36: #{tpu_custom_call.1} parent=23 // pred_fallthru
          _
      $region24: #{tpu_custom_call.1} parent=5 // pred_fallthru
        _
      %p277 = scmp.le.s32.totalorder 2, %s13
      // Predicated region
      $region37: #{tpu_custom_call.1} parent=5 // pred_check
        %p278 = pneg %p277
      $region38: #{tpu_custom_call.1} parent=5 // pred_check_branch
        %280 = sbr.rel (%p278) target = $region40
      $region39: #{tpu_custom_call.1} parent=5 // pred_region
        %s281 = ssub.s32 %s13, 2
        // Predicated region
        $region41: #{tpu_custom_call.1} parent=39 // pred_check
          %p282 = pneg %p82
        $region42: #{tpu_custom_call.1} parent=39 // pred_check_branch
          %284 = sbr.rel (%p282) target = $region44
        $region43: #{tpu_custom_call.1} parent=39 // pred_region
          %s285 = sand.u32 %s67, 1
          %s286 = scalar_lea.sflag [#allocation5], %s285
          %s287 = sand.u32 %s67, 1
          %s288 = smul.addr %s287, 8
          %s289 = scalar_lea.vmem [#allocation6], %s288
          %291 = dma.done %s286, 128
        $region44: #{tpu_custom_call.1} parent=39 // pred_fallthru
          _
      $region40: #{tpu_custom_call.1} parent=5 // pred_fallthru
        _
    $region6: #{tpu_custom_call.1} parent=1 // loop_footer
      %s17 = sadd.s32 1, %s13
    $region7: #{tpu_custom_call.1} parent=1 // loop_footer_branch
      %12 = sbr.rel target = $region3
    $region8: #{tpu_custom_call.1} parent=1 // loop_exit
      _
    %292 = vsyncpa [#allocation4], 1
    %s293 = scalar_lea.sflag [#allocation4], 1
    %294 = vsyncpa %s293, 1
    %295 = vsyncpa [#allocation5], 1
    %s296 = scalar_lea.sflag [#allocation5], 1
    %297 = vsyncpa %s296, 1

</llo_original>
